<compile_context>
chip_gen: v7x
topology: tpu7x:2x2x1
jax: 0.10.0
libtpu: 0.0.40
codegen_flags: <defaults>
</compile_context>

<pallas_src>
import functools

import jax
import jax.numpy as jnp
from jax.experimental import pallas as pl
from jax.experimental.pallas import tpu as pltpu


def _two_body_kernel(r_ref, mask_ref, idx_ref, exps_ref, out_ref, *, cutoff):
    # Zero the resident (F, N_pad) accumulator on the first edge tile.
    @pl.when(pl.program_id(0) == 0)
    def _():
        out_ref[...] = jnp.zeros_like(out_ref)

    r = r_ref[...]              # (1, TE) f32, edges on lanes
    m = mask_ref[...]           # (1, TE) f32 in {0, 1}
    idx = idx_ref[...]          # (1, TE) i32  (central-atom index, 0 for padding)
    exps = exps_ref[...]        # (F, 1)  f32, already clamped >= 2 in the wrapper

    # RadialExpansion envelope with the species mask folded in BEFORE the
    # power (exps >= 2 > 0, so f == 0 gives an exact 0 contribution).
    f = jnp.maximum(2.0 * (1.0 - r * (1.0 / cutoff)), 0.0) * m       # (1, TE)

    # Log-hoisted power: f ** exps = exp(exps * log f).  Guard f == 0 with a
    # large-negative finite value so exp() returns an exact 0 (no inf/NaN).
    lf = jnp.where(f > 0.0, jnp.log(f), -1e30)                       # (1, TE)
    f_edge = jnp.exp(exps * lf)                                      # (F, TE)

    # One-hot of the central-atom index: atoms on sublanes, edges on lanes.
    n_pad = out_ref.shape[1]
    te = r.shape[1]
    rows = jax.lax.broadcasted_iota(jnp.int32, (n_pad, te), 0)       # (N_pad, TE)
    onehot = (idx == rows).astype(jnp.float32)                       # (N_pad, TE)

    # out[f, n] += sum_e f_edge[f, e] * onehot[n, e]   (MXU, edges contracted)
    out_ref[...] += jax.lax.dot_general(
        f_edge, onehot,
        dimension_numbers=(((1,), (1,)), ((), ())),
        preferred_element_type=jnp.float32,
    )


def two_body_descriptor(r, neighbour_list, Z, exponents, n_atoms,
                        *, Z1, Z2, cutoff, edge_tile=512):
    """r: (E,) f32, neighbour_list: (2, E) int, Z: (N,) int, exponents: (F,) f32.
    Returns (n_atoms, F) f32, identical to the PyTorch forward."""
    E = int(r.shape[0])
    F = int(exponents.shape[0])

    i = neighbour_list[0].astype(jnp.int32)
    j = neighbour_list[1].astype(jnp.int32)

    # Species mask computed once in the wrapper (1 f32 per edge instead of
    # two int columns); cheap XLA gathers, layout prep only.
    mask = ((Z[i] == Z1) & (Z[j] == Z2)).astype(jnp.float32)

    # Pad the edge stream to a multiple of the tile; padded edges carry
    # mask = 0 (exact-zero contribution) and idx = 0.
    e_pad = max(edge_tile, pl.cdiv(E, edge_tile) * edge_tile)
    pad = e_pad - E
    r_row = jnp.pad(r.astype(jnp.float32), (0, pad))[None, :]        # (1, E_pad)
    m_row = jnp.pad(mask, (0, pad))[None, :]                         # (1, E_pad)
    idx_row = jnp.pad(i, (0, pad))[None, :]                          # (1, E_pad)

    # Lane-dense output: atoms on the lane axis, padded to a multiple of 128.
    n_pad = max(128, pl.cdiv(n_atoms, 128) * 128)

    exps = jnp.maximum(exponents.astype(jnp.float32), 2.0)[:, None]  # (F, 1)

    grid = (e_pad // edge_tile,)

    cost = pl.CostEstimate(
        flops=2 * e_pad * n_pad * F,
        transcendentals=e_pad * (F + 1),
        bytes_accessed=12 * e_pad + 4 * F + 4 * F * n_pad,
    )

    kernel = functools.partial(_two_body_kernel, cutoff=float(cutoff))

    out = pl.pallas_call(
        kernel,
        out_shape=jax.ShapeDtypeStruct((F, n_pad), jnp.float32),
        grid_spec=pltpu.PrefetchScalarGridSpec(
            num_scalar_prefetch=0,
            grid=grid,
            in_specs=[
                pl.BlockSpec((1, edge_tile), lambda e: (0, e)),   # r
                pl.BlockSpec((1, edge_tile), lambda e: (0, e)),   # mask
                pl.BlockSpec((1, edge_tile), lambda e: (0, e)),   # central idx
                pl.BlockSpec((F, 1), lambda e: (0, 0)),           # exponents
            ],
            out_specs=pl.BlockSpec((F, n_pad), lambda e: (0, 0)),
        ),
        compiler_params=pltpu.CompilerParams(
            dimension_semantics=("arbitrary",),   # edge axis is a reduction
            vmem_limit_bytes=32 * 1024 * 1024,
        ),
        cost_estimate=cost,
    )(r_row, m_row, idx_row, exps)                                   # (F, N_pad)

    # Back to the PyTorch (n_atoms, F) layout.
    return out[:, :n_atoms].T


def _reference(r, neighbour_list, Z, exponents, n_atoms, *, Z1, Z2, cutoff):
    """Pure-JAX reference mirroring the PyTorch forward."""
    i = neighbour_list[0]
    j = neighbour_list[1]
    mask = (Z[i] == Z1) & (Z[j] == Z2)
    f = jnp.maximum(2.0 * (1.0 - r / cutoff), 0.0)
    exps = jnp.maximum(exponents, 2.0)
    f_edge = f[:, None] ** exps[None, :]
    f_edge = f_edge * mask[:, None].astype(jnp.float32)
    out = jnp.zeros((n_atoms, exponents.shape[0]), jnp.float32)
    return out.at[i].add(f_edge)


if __name__ == "__main__":
    # Module hyper-parameters (TwoBodyDescriptor(Z1=1, Z2=8))
    Z1, Z2 = 1, 8
    cutoff = 5.0
    features = 8
    max_power = 8.0

    # Deterministic parameter init, same formula as RadialExpansion.__init__
    beta = (max_power / 2.0) ** (1.0 / (features - 1))
    exponents = jnp.array([2.0 * beta ** k for k in range(features)],
                          dtype=jnp.float32)

    # Small synthetic AtomicGraph: 8 atoms, 300 edges (not a tile multiple, so
    # edge padding is exercised), edge_tile=128 -> 3 grid steps (accumulation
    # across the edge axis is exercised too).
    n_atoms = 8
    n_edges = 300
    edge_tile = 128

    key = jax.random.PRNGKey(0)
    k1, k2, k3, k4 = jax.random.split(key, 4)

    Z = jax.random.choice(k1, jnp.array([1, 8], dtype=jnp.int32), (n_atoms,))
    nl_i = jax.random.randint(k2, (n_edges,), 0, n_atoms, dtype=jnp.int32)
    nl_j = jax.random.randint(k3, (n_edges,), 0, n_atoms, dtype=jnp.int32)
    neighbour_list = jnp.stack([nl_i, nl_j], axis=0)      # (2, E)
    r = jax.random.uniform(k4, (n_edges,), jnp.float32, 0.5, 6.0)  # edge lengths

    out = two_body_descriptor(r, neighbour_list, Z, exponents, n_atoms,
                              Z1=Z1, Z2=Z2, cutoff=cutoff, edge_tile=edge_tile)
    out = jax.block_until_ready(out)

    ref = _reference(r, neighbour_list, Z, exponents, n_atoms,
                     Z1=Z1, Z2=Z2, cutoff=cutoff)
    assert out.shape == (n_atoms, features)
    assert jnp.allclose(out, ref, rtol=1e-4, atol=1e-4), (out, ref)

    print("KERNEL_OK")
</pallas_src>

<mosaic_0001>
module attributes {stable_mosaic.version = 11 : i64} {
  func.func @_two_body_kernel(%arg0: i32, %arg1: memref<1x128xf32, #tpu.memory_space<vmem>>, %arg2: memref<1x128xf32, #tpu.memory_space<vmem>>, %arg3: memref<1x128xi32, #tpu.memory_space<vmem>>, %arg4: memref<8x1xf32, #tpu.memory_space<vmem>>, %arg5: memref<8x128xf32, #tpu.memory_space<vmem>>) attributes {dimension_semantics = [#tpu.dimension_semantics<arbitrary>], iteration_bounds = array<i64: 3>, scalar_prefetch = 0 : i64, scratch_operands = 0 : i64, tpu.core_type = #tpu.core_type<tc>, window_params = [{transform_indices = @transform_0, window_bounds = array<i64: 1, 128>}, {transform_indices = @transform_1, window_bounds = array<i64: 1, 128>}, {transform_indices = @transform_2, window_bounds = array<i64: 1, 128>}, {pipeline_mode = #tpu.pipeline_mode<synchronous>, transform_indices = @transform_3, window_bounds = array<i64: 8, 1>}, {pipeline_mode = #tpu.pipeline_mode<synchronous>, transform_indices = @transform_4, window_bounds = array<i64: 8, 128>}]} {
    %c0_i32 = arith.constant 0 : i32
    %0 = arith.cmpi eq, %arg0, %c0_i32 : i32
    %1 = arith.extui %0 : i1 to i32
    %c0_i32_0 = arith.constant 0 : i32
    %2 = arith.cmpi ne, %1, %c0_i32_0 : i32
    scf.if %2 {
      %cst_18 = arith.constant 0.000000e+00 : f32
      %34 = vector.broadcast %cst_18 : f32 to vector<8x128xf32>
      %c0_19 = arith.constant 0 : index
      %c0_20 = arith.constant 0 : index
      %35 = vector.load %arg5[%c0_19, %c0_20] : memref<8x128xf32, #tpu.memory_space<vmem>>, vector<8x128xf32>
      tpu.vector_store %arg5[%c0_19, %c0_20], %34 {strides = array<i32>} : memref<8x128xf32, #tpu.memory_space<vmem>>, vector<8x128xf32>,
    } else {
    }
    %c0 = arith.constant 0 : index
    %c0_1 = arith.constant 0 : index
    %3 = vector.load %arg1[%c0, %c0_1] : memref<1x128xf32, #tpu.memory_space<vmem>>, vector<1x128xf32>
    %c0_2 = arith.constant 0 : index
    %c0_3 = arith.constant 0 : index
    %4 = vector.load %arg2[%c0_2, %c0_3] : memref<1x128xf32, #tpu.memory_space<vmem>>, vector<1x128xf32>
    %c0_4 = arith.constant 0 : index
    %c0_5 = arith.constant 0 : index
    %5 = vector.load %arg3[%c0_4, %c0_5] : memref<1x128xi32, #tpu.memory_space<vmem>>, vector<1x128xi32>
    %c0_6 = arith.constant 0 : index
    %c0_7 = arith.constant 0 : index
    %6 = vector.load %arg4[%c0_6, %c0_7] : memref<8x1xf32, #tpu.memory_space<vmem>>, vector<8x1xf32>
    %cst = arith.constant 2.000000e-01 : f32
    %7 = vector.broadcast %cst : f32 to vector<1x128xf32>
    %8 = arith.mulf %3, %7 : vector<1x128xf32>
    %cst_8 = arith.constant 1.000000e+00 : f32
    %9 = vector.broadcast %cst_8 : f32 to vector<1x128xf32>
    %10 = arith.subf %9, %8 : vector<1x128xf32>
    %cst_9 = arith.constant 2.000000e+00 : f32
    %11 = vector.broadcast %cst_9 : f32 to vector<1x128xf32>
    %12 = arith.mulf %11, %10 : vector<1x128xf32>
    %cst_10 = arith.constant 0.000000e+00 : f32
    %13 = vector.broadcast %cst_10 : f32 to vector<1x128xf32>
    %14 = arith.maximumf %12, %13 : vector<1x128xf32>
    %15 = arith.mulf %14, %4 : vector<1x128xf32>
    %cst_11 = arith.constant 0.000000e+00 : f32
    %16 = vector.broadcast %cst_11 : f32 to vector<1x128xf32>
    %17 = arith.cmpf ogt, %15, %16 : vector<1x128xf32>
    %18 = math.log %15 : vector<1x128xf32>
    %cst_12 = arith.constant -1.000000e+30 : f32
    %19 = vector.broadcast %cst_12 : f32 to vector<1x128xf32>
    %20 = arith.select %17, %18, %19 : vector<1x128xi1>, vector<1x128xf32>
    %21 = vector.broadcast %6 : vector<8x1xf32> to vector<8x128xf32>
    %22 = vector.broadcast %20 : vector<1x128xf32> to vector<8x128xf32>
    %23 = arith.mulf %21, %22 : vector<8x128xf32>
    %24 = math.exp %23 : vector<8x128xf32>
    %25 = tpu.iota {dimensions = array<i32: 0>} : vector<128x128xi32>
    %26 = vector.broadcast %5 : vector<1x128xi32> to vector<128x128xi32>
    %27 = arith.cmpi eq, %26, %25 : vector<128x128xi32>
    %28 = arith.extui %27 : vector<128x128xi1> to vector<128x128xi32>
    %29 = arith.sitofp %28 : vector<128x128xi32> to vector<128x128xf32>
    %c0_13 = arith.constant 0 : index
    %c0_14 = arith.constant 0 : index
    %30 = vector.load %arg5[%c0_13, %c0_14] : memref<8x128xf32, #tpu.memory_space<vmem>>, vector<8x128xf32>
    %cst_15 = arith.constant dense<0.000000e+00> : vector<8x128xf32>
    %31 = tpu.matmul %24, %29, %cst_15 {dimension_numbers = #tpu.dot_dimension_numbers<[1], [1], [0], [0], [0, 0, 1, 0], [], []>} : vector<8x128xf32>, vector<128x128xf32>, vector<8x128xf32> -> vector<8x128xf32>
    %32 = arith.addf %30, %31 : vector<8x128xf32>
    %c0_16 = arith.constant 0 : index
    %c0_17 = arith.constant 0 : index
    %33 = vector.load %arg5[%c0_16, %c0_17] : memref<8x128xf32, #tpu.memory_space<vmem>>, vector<8x128xf32>
    tpu.vector_store %arg5[%c0_16, %c0_17], %32 {strides = array<i32>} : memref<8x128xf32, #tpu.memory_space<vmem>>, vector<8x128xf32>,
    return
  }
  func.func @transform_0(%arg0: i32) -> (i32, i32) {
    %c0_i32 = arith.constant 0 : i32
    %c0_i32_0 = arith.constant 0 : i32
    return %c0_i32, %arg0 : i32, i32
  }
  func.func @transform_1(%arg0: i32) -> (i32, i32) {
    %c0_i32 = arith.constant 0 : i32
    %c0_i32_0 = arith.constant 0 : i32
    return %c0_i32, %arg0 : i32, i32
  }
  func.func @transform_2(%arg0: i32) -> (i32, i32) {
    %c0_i32 = arith.constant 0 : i32
    %c0_i32_0 = arith.constant 0 : i32
    return %c0_i32, %arg0 : i32, i32
  }
  func.func @transform_3(%arg0: i32) -> (i32, i32) {
    %c0_i32 = arith.constant 0 : i32
    %c0_i32_0 = arith.constant 0 : i32
    %c0_i32_1 = arith.constant 0 : i32
    return %c0_i32, %c0_i32_0 : i32, i32
  }
  func.func @transform_4(%arg0: i32) -> (i32, i32) {
    %c0_i32 = arith.constant 0 : i32
    %c0_i32_0 = arith.constant 0 : i32
    %c0_i32_1 = arith.constant 0 : i32
    return %c0_i32, %c0_i32_0 : i32, i32
  }
}

</mosaic_0001>

<llo_original>
// kernel: tpu_custom_call.1
$region0: #{tpu_custom_call.1}
  #allocation0 [shape = 'u32[]', space=smem, size = 0x4, offset = 0x4, fixed_abs, tag = 'smem constant byte address 0x4 - core index']
  #allocation1 [shape = 'u32[144,128]{1,0:T(1,128)}', space=vmem, size = 0x12000, scoped, tag = 'internal scratch']
  %s0 = inlined_call_operand.vmem [shape: f32[1,384], index: 0, kind: input, shape index: {}]
  %s1 = inlined_call_operand.vmem [shape: f32[1,384], index: 1, kind: input, shape index: {}]
  %s2 = inlined_call_operand.vmem [shape: s32[1,384], index: 2, kind: input, shape index: {}]
  %s3 = inlined_call_operand.vmem [shape: f32[8,1], index: 3, kind: input, shape index: {}]
  %s4 = inlined_call_operand.hbm [shape: f32[8,128], index: 4, kind: output, shape index: {}]
  %s5 = sld [smem:[#allocation0]]
  $region53: #{tpu_custom_call.1} parent=0
    _
  %s7 = ssub.s32 1, %s5
  %s8 = scalar_select 0, %s7, %s5
  $region1: #{tpu_custom_call.1} parent=0
    #allocation2 [shape = 'u8[4096]{0}', space=vmem, size = 0x1000, scoped, tag = 'output window, operand 0, single buffered']
    #allocation3 [shape = 's32[2]{0}', space=sflag, size = 0x8, scoped, tag = 'scoped memory for tpu_custom_call.1']
    %9 = vsyncpa [#allocation3], 0
    loop: start=0, step=1, limit=5
    $region2: #{tpu_custom_call.1} parent=1 // loop_pre_header
      _
    $region3: #{tpu_custom_call.1} parent=1 // loop_header
      %s11 = sphi 0, %s15
      %p12 = scmp.ge.s32.totalorder %s11, 5
      %s21 = sphi 0, %s23
      %s24 = sphi 0, %s21
      %s25 = sphi 0, %s24
      %s41 = sphi 0, %s25
      %s47 = sphi 0, %s49
      %s50 = sphi 0, %s47
      %s51 = sphi 0, %s50
      %s67 = sphi 0, %s51
      %s73 = sphi 0, %s75
      %s76 = sphi 0, %s73
      %s77 = sphi 0, %s76
      %s93 = sphi 0, %s77
      %s97 = sphi 0, %s97
      %s99 = sphi 0, %s97
      %s100 = sphi 0, %s99
      %s114 = sphi 0, %s100
      %s118 = sphi 0, %s118
      %s120 = sphi 0, %s118
      %s121 = sphi 0, %s120
      %s135 = sphi 0, %s121
    $region4: #{tpu_custom_call.1} parent=1 // loop_header_branch
      %14 = sbr.rel (%p12) target = $region8
    $region5: #{tpu_custom_call.1} parent=1 // loop_body
      %s16 = ssub.s32 %s11, 1
      %s17 = ssub.s32 %s11, 2
      %s18 = sadd.s32 %s11, 1
      %s19 = ssub.s32 %s11, %s18
      %p20 = scmp.eq.s32.totalorder %s19, 0
      %s22 = sadd.s32 %s21, 1
      %s23 = scalar_select %p20, %s21, %s22
      %p26 = pneg %p20
      %p27 = scmp.eq.s32.totalorder %s11, 2
      %p28 = por %p26, %p27
      %p29 = scmp.ne.s32.totalorder %s21, %s24
      %p30 = scmp.eq.s32.totalorder %s11, 0
      %p31 = por %p29, %p30
      %p32 = scmp.ne.s32.totalorder %s21, %s24
      %p33 = scmp.eq.s32.totalorder %s16, 2
      %p34 = por %p32, %p33
      %p35 = scmp.ne.s32.totalorder %s24, %s25
      %p36 = scmp.eq.s32.totalorder %s16, 0
      %p37 = por %p35, %p36
      %p38 = scmp.ne.s32.totalorder %s24, %s25
      %p39 = scmp.eq.s32.totalorder %s17, 2
      %p40 = por %p38, %p39
      %p42 = scmp.ne.s32.totalorder %s25, %s41
      %p43 = scmp.eq.s32.totalorder %s17, 0
      %p44 = por %p42, %p43
      %s45 = ssub.s32 %s11, %s18
      %p46 = scmp.eq.s32.totalorder %s45, 0
      %s48 = sadd.s32 %s47, 1
      %s49 = scalar_select %p46, %s47, %s48
      %p52 = pneg %p46
      %p53 = scmp.eq.s32.totalorder %s11, 2
      %p54 = por %p52, %p53
      %p55 = scmp.ne.s32.totalorder %s47, %s50
      %p56 = scmp.eq.s32.totalorder %s11, 0
      %p57 = por %p55, %p56
      %p58 = scmp.ne.s32.totalorder %s47, %s50
      %p59 = scmp.eq.s32.totalorder %s16, 2
      %p60 = por %p58, %p59
      %p61 = scmp.ne.s32.totalorder %s50, %s51
      %p62 = scmp.eq.s32.totalorder %s16, 0
      %p63 = por %p61, %p62
      %p64 = scmp.ne.s32.totalorder %s50, %s51
      %p65 = scmp.eq.s32.totalorder %s17, 2
      %p66 = por %p64, %p65
      %p68 = scmp.ne.s32.totalorder %s51, %s67
      %p69 = scmp.eq.s32.totalorder %s17, 0
      %p70 = por %p68, %p69
      %s71 = ssub.s32 %s11, %s18
      %p72 = scmp.eq.s32.totalorder %s71, 0
      %s74 = sadd.s32 %s73, 1
      %s75 = scalar_select %p72, %s73, %s74
      %p78 = pneg %p72
      %p79 = scmp.eq.s32.totalorder %s11, 2
      %p80 = por %p78, %p79
      %p81 = scmp.ne.s32.totalorder %s73, %s76
      %p82 = scmp.eq.s32.totalorder %s11, 0
      %p83 = por %p81, %p82
      %p84 = scmp.ne.s32.totalorder %s73, %s76
      %p85 = scmp.eq.s32.totalorder %s16, 2
      %p86 = por %p84, %p85
      %p87 = scmp.ne.s32.totalorder %s76, %s77
      %p88 = scmp.eq.s32.totalorder %s16, 0
      %p89 = por %p87, %p88
      %p90 = scmp.ne.s32.totalorder %s76, %s77
      %p91 = scmp.eq.s32.totalorder %s17, 2
      %p92 = por %p90, %p91
      %p94 = scmp.ne.s32.totalorder %s77, %s93
      %p95 = scmp.eq.s32.totalorder %s17, 0
      %p96 = por %p94, %p95
      %s98 = sadd.s32 %s97, 1
      %p101 = scmp.eq.s32.totalorder %s11, 2
      %p102 = scmp.ne.s32.totalorder %s97, %s99
      %p103 = scmp.eq.s32.totalorder %s11, 0
      %p104 = por %p102, %p103
      %p105 = scmp.ne.s32.totalorder %s97, %s99
      %p106 = scmp.eq.s32.totalorder %s16, 2
      %p107 = por %p105, %p106
      %p108 = scmp.ne.s32.totalorder %s99, %s100
      %p109 = scmp.eq.s32.totalorder %s16, 0
      %p110 = por %p108, %p109
      %p111 = scmp.ne.s32.totalorder %s99, %s100
      %p112 = scmp.eq.s32.totalorder %s17, 2
      %p113 = por %p111, %p112
      %p115 = scmp.ne.s32.totalorder %s100, %s114
      %p116 = scmp.eq.s32.totalorder %s17, 0
      %p117 = por %p115, %p116
      %s119 = sadd.s32 %s118, 1
      %p122 = scmp.eq.s32.totalorder %s11, 2
      %p123 = scmp.ne.s32.totalorder %s118, %s120
      %p124 = scmp.eq.s32.totalorder %s11, 0
      %p125 = por %p123, %p124
      %p126 = scmp.ne.s32.totalorder %s118, %s120
      %p127 = scmp.eq.s32.totalorder %s16, 2
      %p128 = por %p126, %p127
      %p129 = scmp.ne.s32.totalorder %s120, %s121
      %p130 = scmp.eq.s32.totalorder %s16, 0
      %p131 = por %p129, %p130
      %p132 = scmp.ne.s32.totalorder %s120, %s121
      %p133 = scmp.eq.s32.totalorder %s17, 2
      %p134 = por %p132, %p133
      %p136 = scmp.ne.s32.totalorder %s121, %s135
      %p137 = scmp.eq.s32.totalorder %s17, 0
      %p138 = por %p136, %p137
      %p139 = scmp.le.s32.totalorder 1, %s11
      %p140 = scmp.lt.s32.totalorder %s11, 4
      %p141 = pnand %p139, %p140
      %p142 = pneg %p141
      // Predicated region
      $region9: #{tpu_custom_call.1} parent=5 // pred_check
        _
      $region10: #{tpu_custom_call.1} parent=5 // pred_check_branch
        %144 = sbr.rel (%p141) target = $region12
      $region11: #{tpu_custom_call.1} parent=5 // pred_region
        %s145 = ssub.s32 %s11, 1
        // Predicated region
        $region13: #{tpu_custom_call.1} parent=11 // pred_check
          %p146 = pneg %p110
        $region14: #{tpu_custom_call.1} parent=11 // pred_check_branch
          %148 = sbr.rel (%p146) target = $region16
        $region15: #{tpu_custom_call.1} parent=11 // pred_region
          _
        $region16: #{tpu_custom_call.1} parent=11 // pred_fallthru
          _
      $region12: #{tpu_custom_call.1} parent=5 // pred_fallthru
        _
      %p149 = scmp.lt.s32.totalorder %s11, 3
      // Predicated region
      $region17: #{tpu_custom_call.1} parent=5 // pred_check
        %p150 = pneg %p149
      $region18: #{tpu_custom_call.1} parent=5 // pred_check_branch
        %152 = sbr.rel (%p150) target = $region20
      $region19: #{tpu_custom_call.1} parent=5 // pred_region
        // Predicated region
        $region21: #{tpu_custom_call.1} parent=19 // pred_check
          %p153 = pneg %p31
        $region22: #{tpu_custom_call.1} parent=19 // pred_check_branch
          %155 = sbr.rel (%p153) target = $region24
        $region23: #{tpu_custom_call.1} parent=19 // pred_region
          %p156 = scmp.lt.s32.totalorder %s11, 2
          %s157 = scalar_select %p156, %s11, 2
          %s158 = scalar_lea.vmem %s0, %s157
        $region24: #{tpu_custom_call.1} parent=19 // pred_fallthru
          _
        // Predicated region
        $region25: #{tpu_custom_call.1} parent=19 // pred_check
          %p159 = pneg %p57
        $region26: #{tpu_custom_call.1} parent=19 // pred_check_branch
          %161 = sbr.rel (%p159) target = $region28
        $region27: #{tpu_custom_call.1} parent=19 // pred_region
          %p162 = scmp.lt.s32.totalorder %s11, 2
          %s163 = scalar_select %p162, %s11, 2
          %s164 = scalar_lea.vmem %s1, %s163
        $region28: #{tpu_custom_call.1} parent=19 // pred_fallthru
          _
        // Predicated region
        $region29: #{tpu_custom_call.1} parent=19 // pred_check
          %p165 = pneg %p83
        $region30: #{tpu_custom_call.1} parent=19 // pred_check_branch
          %167 = sbr.rel (%p165) target = $region32
        $region31: #{tpu_custom_call.1} parent=19 // pred_region
          %p168 = scmp.lt.s32.totalorder %s11, 2
          %s169 = scalar_select %p168, %s11, 2
          %s170 = scalar_lea.vmem %s2, %s169
        $region32: #{tpu_custom_call.1} parent=19 // pred_fallthru
          _
      $region20: #{tpu_custom_call.1} parent=5 // pred_fallthru
        _
      %p171 = scmp.le.s32.totalorder 1, %s11
      %p172 = scmp.lt.s32.totalorder %s11, 4
      %p173 = pnand %p171, %p172
      %p174 = pneg %p173
      // Predicated region
      $region33: #{tpu_custom_call.1} parent=5 // pred_check
        _
      $region34: #{tpu_custom_call.1} parent=5 // pred_check_branch
        %176 = sbr.rel (%p173) target = $region36
      $region35: #{tpu_custom_call.1} parent=5 // pred_region
        %s177 = ssub.s32 %s11, 1
        %p178 = scmp.lt.s32.totalorder %s16, 2
        %s179 = scalar_select %p178, %s16, 2
        %s180 = scalar_lea.vmem %s0, %s179
        %p181 = pneg %p37
        %p182 = pneg %p34
        %p183 = scmp.lt.s32.totalorder %s16, 2
        %s184 = scalar_select %p183, %s16, 2
        %s185 = scalar_lea.vmem %s1, %s184
        %p186 = pneg %p63
        %p187 = pneg %p60
        %p188 = scmp.lt.s32.totalorder %s16, 2
        %s189 = scalar_select %p188, %s16, 2
        %s190 = scalar_lea.vmem %s2, %s189
        %p191 = pneg %p89
        %p192 = pneg %p86
        %p193 = pneg %p110
        %p194 = pneg %p107
        %p195 = pneg %p131
        %p196 = pneg %p128
        %p197 = scmp.lt.s32.totalorder %s16, 2
        %s198 = scalar_select %p197, %s16, 2
        %s199 = scalar_lea.vmem %s0, %s198
        %p200 = scmp.lt.s32.totalorder %s16, 2
        %s201 = scalar_select %p200, %s16, 2
        %s202 = scalar_lea.vmem %s1, %s201
        %p203 = scmp.lt.s32.totalorder %s16, 2
        %s204 = scalar_select %p203, %s16, 2
        %s205 = scalar_lea.vmem %s2, %s204
        %p206 = scmp.eq.s32.totalorder %s16, 0
        // Predicated region
        $region37: #{tpu_custom_call.1} parent=35 // pred_check
          %p207 = pneg %p206
        $region38: #{tpu_custom_call.1} parent=35 // pred_check_branch
          %209 = sbr.rel (%p207) target = $region40
        $region39: #{tpu_custom_call.1} parent=35 // pred_region
          %210 = vst [vmem:[#allocation2] sm:$0xff] 0.0
        $region40: #{tpu_custom_call.1} parent=35 // pred_fallthru
          _
        %v211 = vld [vmem:[%s199] sm:$0x1]
        %v212 = vld [vmem:[%s202] sm:$0x1]
        %v213 = vld [vmem:[%s205] sm:$0x1]
        %v214 = vld [vmem:[%s3] sm:$0xff]
        %v215 = vmul.f32 %v211, 0.2
        %v216 = vsub.f32 1.0, %v215
        %v217 = vmul.f32 %v216, 2.0
        %v218 = vmax.f32 %v217, 0.0
        %v219 = vmul.f32 %v218, %v212
        %vm220 = vcmp.gt.f32.partialorder %v219, 0.0
        %v221 = vlog2.pop %v219
        %v222 = vmul.f32 %v221, 0.6931472
        %v223 = vsel %vm220, %v222, -1e+30
        %225 = vset.pattern.permute.xlu0 0
        %226 = vperm.xlu0 %225, %v214
        %v227 = vpop.permute.xlu0 %226
        %v230 = vlaneseq
        %v231 = vshrl.u32 %v230, 7
        %v232 = vsub.s32 0, %v231
        %v233 = vrot.slane %v223, %v232
        %v235 = vmul.f32 %v227, %v233
        %v236 = vmul.f32 %v235, 1.442695
        %v237 = vpow.pop %v236
        %v238 = vlaneseq
        %v239 = vshrl.u32 %v238, 7
        %v240 = vadd.s32 %v239, 8
        %v241 = vadd.s32 %v239, 16
        %v242 = vadd.s32 %v239, 24
        %v243 = vadd.s32 %v239, 32
        %v244 = vadd.s32 %v239, 40
        %v245 = vadd.s32 %v239, 48
        %v246 = vadd.s32 %v239, 56
        %v247 = vadd.s32 %v239, 64
        %v248 = vadd.s32 %v239, 72
        %v249 = vadd.s32 %v239, 80
        %v250 = vadd.s32 %v239, 88
        %v251 = vadd.s32 %v239, 96
        %v252 = vadd.s32 %v239, 104
        %v253 = vadd.s32 %v239, 112
        %v254 = vadd.s32 %v239, 120
        %v255 = vlaneseq
        %v256 = vshrl.u32 %v255, 7
        %v257 = vsub.s32 0, %v256
        %v258 = vrot.slane %v213, %v257
        %vm259 = vcmp.eq.s32.totalorder %v258, %v239
        %vm260 = vcmp.eq.s32.totalorder %v258, %v240
        %vm261 = vcmp.eq.s32.totalorder %v258, %v241
        %vm262 = vcmp.eq.s32.totalorder %v258, %v242
        %vm263 = vcmp.eq.s32.totalorder %v258, %v243
        %vm264 = vcmp.eq.s32.totalorder %v258, %v244
        %vm265 = vcmp.eq.s32.totalorder %v258, %v245
        %vm266 = vcmp.eq.s32.totalorder %v258, %v246
        %vm267 = vcmp.eq.s32.totalorder %v258, %v247
        %vm268 = vcmp.eq.s32.totalorder %v258, %v248
        %vm269 = vcmp.eq.s32.totalorder %v258, %v249
        %vm270 = vcmp.eq.s32.totalorder %v258, %v250
        %vm271 = vcmp.eq.s32.totalorder %v258, %v251
        %vm272 = vcmp.eq.s32.totalorder %v258, %v252
        %vm273 = vcmp.eq.s32.totalorder %v258, %v253
        %vm274 = vcmp.eq.s32.totalorder %v258, %v254
        %v275 = vsel %vm259, 1, 0
        %v276 = vsel %vm260, 1, 0
        %v277 = vsel %vm261, 1, 0
        %v278 = vsel %vm262, 1, 0
        %v279 = vsel %vm263, 1, 0
        %v280 = vsel %vm264, 1, 0
        %v281 = vsel %vm265, 1, 0
        %v282 = vsel %vm266, 1, 0
        %v283 = vsel %vm267, 1, 0
        %v284 = vsel %vm268, 1, 0
        %v285 = vsel %vm269, 1, 0
        %v286 = vsel %vm270, 1, 0
        %v287 = vsel %vm271, 1, 0
        %v288 = vsel %vm272, 1, 0
        %v289 = vsel %vm273, 1, 0
        %v290 = vsel %vm274, 1, 0
        %v291 = vcvt.s32.f32 %v275
        %v292 = vcvt.s32.f32 %v276
        %v293 = vcvt.s32.f32 %v277
        %v294 = vcvt.s32.f32 %v278
        %v295 = vcvt.s32.f32 %v279
        %v296 = vcvt.s32.f32 %v280
        %v297 = vcvt.s32.f32 %v281
        %v298 = vcvt.s32.f32 %v282
        %v299 = vcvt.s32.f32 %v283
        %v300 = vcvt.s32.f32 %v284
        %v301 = vcvt.s32.f32 %v285
        %v302 = vcvt.s32.f32 %v286
        %v303 = vcvt.s32.f32 %v287
        %v304 = vcvt.s32.f32 %v288
        %v305 = vcvt.s32.f32 %v289
        %v306 = vcvt.s32.f32 %v290
        %v307 = vld [vmem:[#allocation2] sm:$0xff]
        %308 = vmatprep.subr.mxu0 0.0
        %309 = vmatpush1.xpose.msra.mxu0 %v291
        %310 = vmatprep.subr.mxu0 0.0
        %311 = vmatpush1.xpose.msra.mxu0 %v292
        %312 = vmatprep.subr.mxu0 0.0
        %313 = vmatpush1.xpose.msra.mxu0 %v293
        %314 = vmatprep.subr.mxu0 0.0
        %315 = vmatpush1.xpose.msra.mxu0 %v294
        %316 = vmatprep.subr.mxu0 0.0
        %317 = vmatpush1.xpose.msra.mxu0 %v295
        %318 = vmatprep.subr.mxu0 0.0
        %319 = vmatpush1.xpose.msra.mxu0 %v296
        %320 = vmatprep.subr.mxu0 0.0
        %321 = vmatpush1.xpose.msra.mxu0 %v297
        %322 = vmatprep.subr.mxu0 0.0
        %323 = vmatpush1.xpose.msra.mxu0 %v298
        %324 = vmatprep.subr.mxu0 0.0
        %325 = vmatpush1.xpose.msra.mxu0 %v299
        %326 = vmatprep.subr.mxu0 0.0
        %327 = vmatpush1.xpose.msra.mxu0 %v300
        %328 = vmatprep.subr.mxu0 0.0
        %329 = vmatpush1.xpose.msra.mxu0 %v301
        %330 = vmatprep.subr.mxu0 0.0
        %331 = vmatpush1.xpose.msra.mxu0 %v302
        %332 = vmatprep.subr.mxu0 0.0
        %333 = vmatpush1.xpose.msra.mxu0 %v303
        %334 = vmatprep.subr.mxu0 0.0
        %335 = vmatpush1.xpose.msra.mxu0 %v304
        %336 = vmatprep.subr.mxu0 0.0
        %337 = vmatpush1.xpose.msra.mxu0 %v305
        %338 = vmatprep.subr.mxu0 0.0
        %339 = vmatpush1.xpose.msra.mxu0 %v306
        %340 = vmatprep.subr.mxu0 0.0
        %341 = vmatpush1.xpose.msra.mxu0 0.0
        %342 = vmatprep.subr.mxu0 0.0
        %343 = vmatpush1.xpose.msra.mxu0 0.0
        %344 = vmatprep.subr.mxu0 0.0
        %345 = vmatpush1.xpose.msra.mxu0 0.0
        %346 = vmatprep.subr.mxu0 0.0
        %347 = vmatpush1.xpose.msra.mxu0 0.0
        %348 = vmatprep.subr.mxu0 0.0
        %349 = vmatpush1.xpose.msra.mxu0 0.0
        %350 = vmatprep.subr.mxu0 0.0
        %351 = vmatpush1.xpose.msra.mxu0 0.0
        %352 = vmatprep.subr.mxu0 0.0
        %353 = vmatpush1.xpose.msra.mxu0 0.0
        %354 = vmatprep.subr.mxu0 0.0
        %355 = vmatpush1.xpose.msra.mxu0 0.0
        %356 = vmatprep.subr.mxu0 0.0
        %357 = vmatpush1.xpose.msra.mxu0 0.0
        %358 = vmatprep.subr.mxu0 0.0
        %359 = vmatpush1.xpose.msra.mxu0 0.0
        %360 = vmatprep.subr.mxu0 0.0
        %361 = vmatpush1.xpose.msra.mxu0 0.0
        %362 = vmatprep.subr.mxu0 0.0
        %363 = vmatpush1.xpose.msra.mxu0 0.0
        %364 = vmatprep.subr.mxu0 0.0
        %365 = vmatpush1.xpose.msra.mxu0 0.0
        %366 = vmatprep.subr.mxu0 0.0
        %367 = vmatpush1.xpose.msra.mxu0 0.0
        %368 = vmatprep.subr.mxu0 0.0
        %369 = vmatpush1.xpose.msra.mxu0 0.0
        %370 = vmatprep.subr.mxu0 0.0
        %371 = vmatpush1.xpose.msra.mxu0 0.0
        %372 = vmatprep.mubr.f32.mxu0 0.0
        %373 = vmatmul.mubr.f32.gmra.mrb[0].mxu0 %v237
        %v374 = vpop.f32.mrb[0].mxu0
        %v375 = vadd.f32 0.0, %v374
        %v376 = vpop.f32.mrb[0].mxu0
        %377 = vdwg.mxu0
        %v378 = vadd.f32 %v307, %v375
        %379 = vst [vmem:[#allocation2] sm:$0xff] %v378
        // Predicated region
        $region41: #{tpu_custom_call.1} parent=35 // pred_check
          %p380 = pneg %p128
        $region42: #{tpu_custom_call.1} parent=35 // pred_check_branch
          %382 = sbr.rel (%p380) target = $region44
        $region43: #{tpu_custom_call.1} parent=35 // pred_region
          %s384 = ssub.s32 128, 128
          %385 = vsyncadd [#allocation3], %s384
          %s387 = sshll.u32 [#allocation2], 4
          %s388 = int_to_ptr.vmem [resolvable:$true] %s387
          %390 = dma.vmem_to_hbm [thread:$0]  %s388, 128, %s4, [#allocation3]
        $region44: #{tpu_custom_call.1} parent=35 // pred_fallthru
          _
        // Predicated region
        $region45: #{tpu_custom_call.1} parent=35 // pred_check
          %p391 = pneg %p128
        $region46: #{tpu_custom_call.1} parent=35 // pred_check_branch
          %393 = sbr.rel (%p391) target = $region48
        $region47: #{tpu_custom_call.1} parent=35 // pred_region
          %394 = dma.done [#allocation3], 128
        $region48: #{tpu_custom_call.1} parent=35 // pred_fallthru
          _
      $region36: #{tpu_custom_call.1} parent=5 // pred_fallthru
        _
      %p395 = scmp.le.s32.totalorder 2, %s11
      // Predicated region
      $region49: #{tpu_custom_call.1} parent=5 // pred_check
        %p396 = pneg %p395
      $region50: #{tpu_custom_call.1} parent=5 // pred_check_branch
        %398 = sbr.rel (%p396) target = $region52
      $region51: #{tpu_custom_call.1} parent=5 // pred_region
        %s399 = ssub.s32 %s11, 2
      $region52: #{tpu_custom_call.1} parent=5 // pred_fallthru
        _
    $region6: #{tpu_custom_call.1} parent=1 // loop_footer
      %s15 = sadd.s32 1, %s11
    $region7: #{tpu_custom_call.1} parent=1 // loop_footer_branch
      %10 = sbr.rel target = $region3
    $region8: #{tpu_custom_call.1} parent=1 // loop_exit
      _
    %400 = vsyncpa [#allocation3], 1
    %s401 = scalar_lea.sflag [#allocation3], 1
    %402 = vsyncpa %s401, 1

</llo_original>
